<compile_context>
chip_gen: v6e
topology: v6e:2x2x1
jax: 0.10.0
libtpu: 0.0.40
codegen_flags: <defaults>
</compile_context>

<pallas_src>
import functools
import math

import jax
import jax.numpy as jnp
from jax.experimental import pallas as pl
from jax.experimental.pallas import tpu as pltpu

_EPS = 1e-10


# --------------------------- shared in-kernel helpers ---------------------------
def _sigmoid_logsigmoid(q):
    """sigmoid(q) and log(sigmoid(q)) from one shared exp (numerically stable)."""
    t = jnp.exp(-jnp.abs(q))                       # in (0, 1]
    inv = 1.0 / (1.0 + t)                          # sigmoid(|q|)
    q_prob = jnp.where(q >= 0.0, inv, 1.0 - inv)   # sigmoid(q)
    log_sig = jnp.minimum(q, 0.0) - jnp.log(1.0 + t)  # log_sigmoid(q)
    return q_prob, log_sig


def _kl_bernoulli_elem(q, q_prob, log_sig, log_p, log_1mp):
    # KL( Bernoulli(sigmoid(q)) || Bernoulli(prior) ), per element.
    # log(1 - sigmoid(q)) = log_sigmoid(-q) = log_sigmoid(q) - q.
    return q_prob * (log_sig - log_p) + (1.0 - q_prob) * ((log_sig - q) - log_1mp)


def _store_kl_partial(kl_ref, kl, nrows, needs_mask):
    """Per-lane partial sum over this tile's rows -> row 0 of an (8, C) block."""
    tile_r, c = kl.shape
    if needs_mask:
        row = (jax.lax.broadcasted_iota(jnp.int32, (tile_r, c), 0)
               + pl.program_id(0) * tile_r)
        kl = jnp.where(row < nrows, kl, 0.0)
    part = jnp.sum(kl, axis=0, keepdims=True)                    # (1, C)
    out_row = jax.lax.broadcasted_iota(jnp.int32, (8, c), 0)
    kl_ref[...] = jnp.where(out_row == 0, part, 0.0)             # (8, C), aligned store


# ----------------------------- training-mode kernel -----------------------------
def _bernoulli_train_kernel(q_ref, u_ref, sel_ref, qprob_ref, kl_ref, *,
                            nrows, needs_mask, log_p, log_1mp):
    q = q_ref[...]                                   # (TILE_R, C) f32
    q_prob, log_sig = _sigmoid_logsigmoid(q)

    # Hard 2-way gumbel-softmax forward value is 1[q + (g0 - g1) >= 0] with
    # g0 - g1 ~ Logistic(0,1); distribution-identical (and 2 EUP ops cheaper):
    # 1[u < sigmoid(q)] with u ~ U[0,1).  tau never changes the hard argmax.
    sel_ref[...] = jnp.where(u_ref[...] < q_prob, 1.0, 0.0).astype(sel_ref.dtype)
    qprob_ref[...] = q_prob.astype(qprob_ref.dtype)

    kl = _kl_bernoulli_elem(q, q_prob, log_sig, log_p, log_1mp)
    _store_kl_partial(kl_ref, kl, nrows, needs_mask)


# ------------------------------- eval-mode kernel --------------------------------
def _bernoulli_eval_kernel(q_ref, sel_ref, qprob_ref, kl_ref, *,
                           nrows, needs_mask, log_p, log_1mp):
    q = q_ref[...]
    q_prob, log_sig = _sigmoid_logsigmoid(q)

    # argmin over (logsigmoid(q), logsigmoid(-q)) == 1 iff q > 0 (ties -> 0).
    sel_ref[...] = jnp.where(q > 0.0, 1, 0).astype(sel_ref.dtype)
    qprob_ref[...] = q_prob.astype(qprob_ref.dtype)

    kl = _kl_bernoulli_elem(q, q_prob, log_sig, log_p, log_1mp)
    _store_kl_partial(kl_ref, kl, nrows, needs_mask)


# ---------------------------------- wrappers --------------------------------------
def _round_up(x, m):
    return (x + m - 1) // m * m


def _choose_tile_r(r8, c):
    """Tile rows: ~4 MiB/stream, VMEM-bounded for v7x, divisor of r8 when possible."""
    target_bytes = 4 << 20          # per-stream tile bytes
    budget_bytes = 40 << 20         # 2 bufs x ~5 streams must stay under v7x 64 MiB VMEM
    bytes_per_row = 4 * max(c, 1)
    rows = (target_bytes // bytes_per_row) // 8 * 8
    cap = (budget_bytes // (2 * 5 * bytes_per_row)) // 8 * 8
    rows = max(8, min(rows, cap))
    rows = min(rows, r8)
    # Keep >= 2 tiles so the "parallel" grid axis can feed both v7x TensorCores.
    if rows >= r8 and r8 >= 16:
        rows = max(8, (r8 // 2) // 8 * 8)
    # Prefer a divisor of r8 (removes host-side pad + output-slice HBM passes).
    lo = max(8, rows - 64 * 8)
    for cand in range(rows, lo - 1, -8):
        if r8 % cand == 0:
            return cand
    return rows


def _prior_log_terms(prior_prob):
    p = float(prior_prob)
    return math.log(p + _EPS), math.log(1.0 - p + _EPS)


def _run(kernel_fn, q_params, sel_dtype, log_p, log_1mp, key=None):
    R, C = q_params.shape
    r8 = _round_up(R, 8)
    tile_r = _choose_tile_r(r8, C)
    r_pad = _round_up(r8, tile_r)
    needs_mask = (r_pad != R)
    if r_pad != R:
        q_params = jnp.pad(q_params, ((0, r_pad - R), (0, 0)))
    n_tiles = r_pad // tile_r

    tile_spec = pl.BlockSpec((tile_r, C), lambda i: (i, 0))
    kl_spec = pl.BlockSpec((8, C), lambda i: (i, 0))

    in_specs = [tile_spec]
    args = [q_params]
    if key is not None:
        # Uniform noise for the Bernoulli draw (replaces the in-kernel logistic sample).
        args.append(jax.random.uniform(key, (r_pad, C), dtype=jnp.float32))
        in_specs.append(tile_spec)

    kernel = functools.partial(kernel_fn, nrows=R, needs_mask=needs_mask,
                               log_p=log_p, log_1mp=log_1mp)

    sel, qprob, kl_part = pl.pallas_call(
        kernel,
        grid=(n_tiles,),
        out_shape=(
            jax.ShapeDtypeStruct((r_pad, C), sel_dtype),          # selectors
            jax.ShapeDtypeStruct((r_pad, C), jnp.float32),        # q_prob
            jax.ShapeDtypeStruct((n_tiles * 8, C), jnp.float32),  # KL partials (row 0 of each 8-block)
        ),
        in_specs=in_specs,
        out_specs=(tile_spec, tile_spec, kl_spec),
        compiler_params=pltpu.CompilerParams(
            dimension_semantics=("parallel",),
            vmem_limit_bytes=48 << 20),
    )(*args)

    if r_pad != R:
        sel = sel[:R]
        qprob = qprob[:R]
    return sel, qprob, jnp.sum(kl_part)


def bernoulli_variable_forward_train(q_params, key, tau, prior_prob):
    """Training forward: (selectors f32 in {0,1}, q_prob, KL scalar).

    `tau` is accepted for API parity but cannot change the hard (forward)
    gumbel-softmax value; noise is drawn from `key` in the wrapper.
    """
    del tau
    log_p, log_1mp = _prior_log_terms(prior_prob)
    return _run(_bernoulli_train_kernel, q_params.astype(jnp.float32),
                jnp.float32, log_p, log_1mp, key=key)


def bernoulli_variable_forward_eval(q_params, prior_prob):
    """Eval forward: (selectors int32 (torch gives int64), q_prob, KL scalar)."""
    log_p, log_1mp = _prior_log_terms(prior_prob)
    return _run(_bernoulli_eval_kernel, q_params.astype(jnp.float32),
                jnp.int32, log_p, log_1mp, key=None)


if __name__ == "__main__":
    key = jax.random.PRNGKey(0)
    k_q, k_noise = jax.random.split(key)

    # Module __init__: q_params = uniform_(zeros(shape)); prior_prob scalar.
    shape = (16, 128)                 # small lane-aligned parameter grid
    q_params = jax.random.uniform(k_q, shape, dtype=jnp.float32)   # U[0, 1)
    prior_prob = 0.5
    tau = 0.5                         # AnnealedParameter at epoch 0 -> start_temp

    sel_tr, qprob_tr, kl_tr = bernoulli_variable_forward_train(q_params, k_noise, tau, prior_prob)
    sel_ev, qprob_ev, kl_ev = bernoulli_variable_forward_eval(q_params, prior_prob)
    jax.block_until_ready((sel_tr, qprob_tr, kl_tr, sel_ev, qprob_ev, kl_ev))

    # --- sanity checks against the analytic forward semantics ---
    assert sel_tr.shape == shape and sel_ev.shape == shape
    assert set(jnp.unique(sel_tr).tolist()) <= {0.0, 1.0}
    assert bool(jnp.all(sel_ev == (q_params > 0).astype(jnp.int32)))

    qp = jax.nn.sigmoid(q_params)
    kl_ref = jnp.sum(qp * (jnp.log(qp) - math.log(prior_prob + _EPS))
                     + (1.0 - qp) * (jnp.log1p(-qp) - math.log(1.0 - prior_prob + _EPS)))
    assert bool(jnp.allclose(qprob_tr, qp, atol=1e-5))
    assert bool(jnp.allclose(qprob_ev, qp, atol=1e-5))
    assert bool(jnp.allclose(kl_tr, kl_ref, rtol=1e-3, atol=1e-3))
    assert bool(jnp.allclose(kl_ev, kl_ref, rtol=1e-3, atol=1e-3))

    print("KERNEL_OK")
</pallas_src>

<mosaic_0001>
module attributes {stable_mosaic.version = 11 : i64} {
  func.func @_bernoulli_train_kernel(%arg0: i32, %arg1: memref<8x128xf32, #tpu.memory_space<vmem>>, %arg2: memref<8x128xf32, #tpu.memory_space<vmem>>, %arg3: memref<8x128xf32, #tpu.memory_space<vmem>>, %arg4: memref<8x128xf32, #tpu.memory_space<vmem>>, %arg5: memref<8x128xf32, #tpu.memory_space<vmem>>) attributes {dimension_semantics = [#tpu.dimension_semantics<parallel>], iteration_bounds = array<i64: 2>, scalar_prefetch = 0 : i64, scratch_operands = 0 : i64, tpu.core_type = #tpu.core_type<tc>, window_params = [{transform_indices = @transform_0, window_bounds = array<i64: 8, 128>}, {transform_indices = @transform_1, window_bounds = array<i64: 8, 128>}, {transform_indices = @transform_2, window_bounds = array<i64: 8, 128>}, {transform_indices = @transform_3, window_bounds = array<i64: 8, 128>}, {transform_indices = @transform_4, window_bounds = array<i64: 8, 128>}]} {
    %c0 = arith.constant 0 : index
    %c0_0 = arith.constant 0 : index
    %0 = vector.load %arg1[%c0, %c0_0] : memref<8x128xf32, #tpu.memory_space<vmem>>, vector<8x128xf32>
    %1 = math.absf %0 : vector<8x128xf32>
    %cst = arith.constant 0.000000e+00 : f32
    %2 = vector.broadcast %cst : f32 to vector<8x128xf32>
    %3 = arith.subf %2, %1 : vector<8x128xf32>
    %4 = math.exp %3 : vector<8x128xf32>
    %cst_1 = arith.constant 1.000000e+00 : f32
    %5 = vector.broadcast %cst_1 : f32 to vector<8x128xf32>
    %6 = arith.addf %5, %4 : vector<8x128xf32>
    %cst_2 = arith.constant 1.000000e+00 : f32
    %7 = vector.broadcast %cst_2 : f32 to vector<8x128xf32>
    %8 = arith.divf %7, %6 : vector<8x128xf32>
    %cst_3 = arith.constant 0.000000e+00 : f32
    %9 = vector.broadcast %cst_3 : f32 to vector<8x128xf32>
    %10 = arith.cmpf oge, %0, %9 : vector<8x128xf32>
    %cst_4 = arith.constant 1.000000e+00 : f32
    %11 = vector.broadcast %cst_4 : f32 to vector<8x128xf32>
    %12 = arith.subf %11, %8 : vector<8x128xf32>
    %13 = arith.select %10, %8, %12 : vector<8x128xi1>, vector<8x128xf32>
    %cst_5 = arith.constant 0.000000e+00 : f32
    %14 = vector.broadcast %cst_5 : f32 to vector<8x128xf32>
    %15 = arith.minimumf %0, %14 : vector<8x128xf32>
    %cst_6 = arith.constant 1.000000e+00 : f32
    %16 = vector.broadcast %cst_6 : f32 to vector<8x128xf32>
    %17 = arith.addf %16, %4 : vector<8x128xf32>
    %18 = math.log %17 : vector<8x128xf32>
    %19 = arith.subf %15, %18 : vector<8x128xf32>
    %c0_7 = arith.constant 0 : index
    %c0_8 = arith.constant 0 : index
    %20 = vector.load %arg2[%c0_7, %c0_8] : memref<8x128xf32, #tpu.memory_space<vmem>>, vector<8x128xf32>
    %21 = arith.cmpf olt, %20, %13 : vector<8x128xf32>
    %cst_9 = arith.constant 1.000000e+00 : f32
    %cst_10 = arith.constant 0.000000e+00 : f32
    %22 = vector.broadcast %cst_9 : f32 to vector<8x128xf32>
    %23 = vector.broadcast %cst_10 : f32 to vector<8x128xf32>
    %24 = arith.select %21, %22, %23 : vector<8x128xi1>, vector<8x128xf32>
    %c0_11 = arith.constant 0 : index
    %c0_12 = arith.constant 0 : index
    %25 = vector.load %arg3[%c0_11, %c0_12] : memref<8x128xf32, #tpu.memory_space<vmem>>, vector<8x128xf32>
    tpu.vector_store %arg3[%c0_11, %c0_12], %24 {strides = array<i32>} : memref<8x128xf32, #tpu.memory_space<vmem>>, vector<8x128xf32>,
    %c0_13 = arith.constant 0 : index
    %c0_14 = arith.constant 0 : index
    %26 = vector.load %arg4[%c0_13, %c0_14] : memref<8x128xf32, #tpu.memory_space<vmem>>, vector<8x128xf32>
    tpu.vector_store %arg4[%c0_13, %c0_14], %13 {strides = array<i32>} : memref<8x128xf32, #tpu.memory_space<vmem>>, vector<8x128xf32>,
    %cst_15 = arith.constant -0.693147182 : f32
    %27 = vector.broadcast %cst_15 : f32 to vector<8x128xf32>
    %28 = arith.subf %19, %27 : vector<8x128xf32>
    %29 = arith.mulf %13, %28 : vector<8x128xf32>
    %cst_16 = arith.constant 1.000000e+00 : f32
    %30 = vector.broadcast %cst_16 : f32 to vector<8x128xf32>
    %31 = arith.subf %30, %13 : vector<8x128xf32>
    %32 = arith.subf %19, %0 : vector<8x128xf32>
    %cst_17 = arith.constant -0.693147182 : f32
    %33 = vector.broadcast %cst_17 : f32 to vector<8x128xf32>
    %34 = arith.subf %32, %33 : vector<8x128xf32>
    %35 = arith.mulf %31, %34 : vector<8x128xf32>
    %36 = arith.addf %29, %35 : vector<8x128xf32>
    %cst_18 = arith.constant dense<0.000000e+00> : vector<128xf32>
    %37 = vector.multi_reduction <add>, %36, %cst_18 [0] : vector<8x128xf32> to vector<128xf32>
    %38 = vector.shape_cast %37 : vector<128xf32> to vector<1x128xf32>
    %39 = tpu.iota {dimensions = array<i32: 0>} : vector<8x128xi32>
    %c0_i32 = arith.constant 0 : i32
    %40 = vector.broadcast %c0_i32 : i32 to vector<8x128xi32>
    %41 = arith.cmpi eq, %39, %40 : vector<8x128xi32>
    %cst_19 = arith.constant 0.000000e+00 : f32
    %42 = vector.shape_cast %38 : vector<1x128xf32> to vector<1x128xf32>
    %43 = vector.broadcast %42 : vector<1x128xf32> to vector<8x128xf32>
    %44 = vector.broadcast %cst_19 : f32 to vector<8x128xf32>
    %45 = arith.select %41, %43, %44 : vector<8x128xi1>, vector<8x128xf32>
    %c0_20 = arith.constant 0 : index
    %c0_21 = arith.constant 0 : index
    %46 = vector.load %arg5[%c0_20, %c0_21] : memref<8x128xf32, #tpu.memory_space<vmem>>, vector<8x128xf32>
    tpu.vector_store %arg5[%c0_20, %c0_21], %45 {strides = array<i32>} : memref<8x128xf32, #tpu.memory_space<vmem>>, vector<8x128xf32>,
    return
  }
  func.func @transform_0(%arg0: i32) -> (i32, i32) {
    %c0_i32 = arith.constant 0 : i32
    %c0_i32_0 = arith.constant 0 : i32
    return %arg0, %c0_i32 : i32, i32
  }
  func.func @transform_1(%arg0: i32) -> (i32, i32) {
    %c0_i32 = arith.constant 0 : i32
    %c0_i32_0 = arith.constant 0 : i32
    return %arg0, %c0_i32 : i32, i32
  }
  func.func @transform_2(%arg0: i32) -> (i32, i32) {
    %c0_i32 = arith.constant 0 : i32
    %c0_i32_0 = arith.constant 0 : i32
    return %arg0, %c0_i32 : i32, i32
  }
  func.func @transform_3(%arg0: i32) -> (i32, i32) {
    %c0_i32 = arith.constant 0 : i32
    %c0_i32_0 = arith.constant 0 : i32
    return %arg0, %c0_i32 : i32, i32
  }
  func.func @transform_4(%arg0: i32) -> (i32, i32) {
    %c0_i32 = arith.constant 0 : i32
    %c0_i32_0 = arith.constant 0 : i32
    return %arg0, %c0_i32 : i32, i32
  }
}

</mosaic_0001>

<llo_original>
// kernel: tpu_custom_call.1
$region0: #{tpu_custom_call.1}
  #allocation0 [shape = 'u32[]', space=smem, size = 0x4, offset = 0x4, fixed_abs, tag = 'smem constant byte address 0x4 - core index']
  #allocation1 [shape = 'u32[144,128]{1,0:T(1,128)}', space=vmem, size = 0x12000, scoped, tag = 'internal scratch']
  %s0 = inlined_call_operand.hbm [shape: f32[16,128], index: 0, kind: input, shape index: {}]
  %s1 = inlined_call_operand.hbm [shape: f32[16,128], index: 1, kind: input, shape index: {}]
  %s2 = inlined_call_operand.hbm [shape: f32[16,128], index: 2, kind: output, shape index: {0}]
  %s3 = inlined_call_operand.hbm [shape: f32[16,128], index: 3, kind: output, shape index: {1}]
  %s4 = inlined_call_operand.hbm [shape: f32[16,128], index: 4, kind: output, shape index: {2}]
  %5 = xla_tuple %s2, %s3, %s4
  %s6 = sld [smem:[#allocation0]]
  $region65: #{tpu_custom_call.1} parent=0
    _
  %s8 = ssub.s32 1, %s6
  %s9 = scalar_select 0, %s8, %s6
  $region1: #{tpu_custom_call.1} parent=0
    #allocation2 [shape = 'u8[8192]{0}', space=vmem, size = 0x2000, scoped, tag = 'input window, operand 0']
    #allocation3 [shape = 's32[2]{0}', space=sflag, size = 0x8, scoped, tag = 'scoped memory for tpu_custom_call.1']
    #allocation4 [shape = 's32[2]{0}', space=sflag, size = 0x8, scoped, tag = 'scoped memory for tpu_custom_call.1']
    #allocation5 [shape = 'u8[8192]{0}', space=vmem, size = 0x2000, scoped, tag = 'input window, operand 1']
    #allocation6 [shape = 's32[2]{0}', space=sflag, size = 0x8, scoped, tag = 'scoped memory for tpu_custom_call.1']
    #allocation7 [shape = 'u8[8192]{0}', space=vmem, size = 0x2000, scoped, tag = 'output window, operand 0']
    #allocation8 [shape = 'u8[8192]{0}', space=vmem, size = 0x2000, scoped, tag = 'output window, operand 1']
    #allocation9 [shape = 's32[2]{0}', space=sflag, size = 0x8, scoped, tag = 'scoped memory for tpu_custom_call.1']
    #allocation10 [shape = 'u8[8192]{0}', space=vmem, size = 0x2000, scoped, tag = 'output window, operand 2']
    %10 = vsyncpa [#allocation3], 0
    %s11 = scalar_lea.sflag [#allocation3], 1
    %12 = vsyncpa %s11, 0
    %13 = vsyncpa [#allocation6], 0
    %s14 = scalar_lea.sflag [#allocation6], 1
    %15 = vsyncpa %s14, 0
    %16 = vsyncpa [#allocation4], 0
    %s17 = scalar_lea.sflag [#allocation4], 1
    %18 = vsyncpa %s17, 0
    %19 = vsyncpa [#allocation9], 0
    %s20 = scalar_lea.sflag [#allocation9], 1
    %21 = vsyncpa %s20, 0
    loop: start=0, step=1, limit=4
    $region2: #{tpu_custom_call.1} parent=1 // loop_pre_header
      _
    $region3: #{tpu_custom_call.1} parent=1 // loop_header
      %s23 = sphi 0, %s27
      %p24 = scmp.ge.s32.totalorder %s23, 4
      %s33 = sphi 0, %s35
      %s36 = sphi 0, %s33
      %s37 = sphi 0, %s36
      %s53 = sphi 0, %s37
      %s59 = sphi 0, %s61
      %s62 = sphi 0, %s59
      %s63 = sphi 0, %s62
      %s79 = sphi 0, %s63
      %s85 = sphi 0, %s87
      %s88 = sphi 0, %s85
      %s89 = sphi 0, %s88
      %s105 = sphi 0, %s89
      %s111 = sphi 0, %s113
      %s114 = sphi 0, %s111
      %s115 = sphi 0, %s114
      %s131 = sphi 0, %s115
      %s137 = sphi 0, %s139
      %s140 = sphi 0, %s137
      %s141 = sphi 0, %s140
      %s157 = sphi 0, %s141
    $region4: #{tpu_custom_call.1} parent=1 // loop_header_branch
      %26 = sbr.rel (%p24) target = $region8
    $region5: #{tpu_custom_call.1} parent=1 // loop_body
      %s28 = ssub.s32 %s23, 1
      %s29 = ssub.s32 %s23, 2
      %s30 = sadd.s32 %s23, 1
      %s31 = ssub.s32 %s23, %s30
      %p32 = scmp.eq.s32.totalorder %s31, 0
      %s34 = sadd.s32 %s33, 1
      %s35 = scalar_select %p32, %s33, %s34
      %p38 = pneg %p32
      %p39 = scmp.eq.s32.totalorder %s23, 1
      %p40 = por %p38, %p39
      %p41 = scmp.ne.s32.totalorder %s33, %s36
      %p42 = scmp.eq.s32.totalorder %s23, 0
      %p43 = por %p41, %p42
      %p44 = scmp.ne.s32.totalorder %s33, %s36
      %p45 = scmp.eq.s32.totalorder %s28, 1
      %p46 = por %p44, %p45
      %p47 = scmp.ne.s32.totalorder %s36, %s37
      %p48 = scmp.eq.s32.totalorder %s28, 0
      %p49 = por %p47, %p48
      %p50 = scmp.ne.s32.totalorder %s36, %s37
      %p51 = scmp.eq.s32.totalorder %s29, 1
      %p52 = por %p50, %p51
      %p54 = scmp.ne.s32.totalorder %s37, %s53
      %p55 = scmp.eq.s32.totalorder %s29, 0
      %p56 = por %p54, %p55
      %s57 = ssub.s32 %s23, %s30
      %p58 = scmp.eq.s32.totalorder %s57, 0
      %s60 = sadd.s32 %s59, 1
      %s61 = scalar_select %p58, %s59, %s60
      %p64 = pneg %p58
      %p65 = scmp.eq.s32.totalorder %s23, 1
      %p66 = por %p64, %p65
      %p67 = scmp.ne.s32.totalorder %s59, %s62
      %p68 = scmp.eq.s32.totalorder %s23, 0
      %p69 = por %p67, %p68
      %p70 = scmp.ne.s32.totalorder %s59, %s62
      %p71 = scmp.eq.s32.totalorder %s28, 1
      %p72 = por %p70, %p71
      %p73 = scmp.ne.s32.totalorder %s62, %s63
      %p74 = scmp.eq.s32.totalorder %s28, 0
      %p75 = por %p73, %p74
      %p76 = scmp.ne.s32.totalorder %s62, %s63
      %p77 = scmp.eq.s32.totalorder %s29, 1
      %p78 = por %p76, %p77
      %p80 = scmp.ne.s32.totalorder %s63, %s79
      %p81 = scmp.eq.s32.totalorder %s29, 0
      %p82 = por %p80, %p81
      %s83 = ssub.s32 %s23, %s30
      %p84 = scmp.eq.s32.totalorder %s83, 0
      %s86 = sadd.s32 %s85, 1
      %s87 = scalar_select %p84, %s85, %s86
      %p90 = pneg %p84
      %p91 = scmp.eq.s32.totalorder %s23, 1
      %p92 = por %p90, %p91
      %p93 = scmp.ne.s32.totalorder %s85, %s88
      %p94 = scmp.eq.s32.totalorder %s23, 0
      %p95 = por %p93, %p94
      %p96 = scmp.ne.s32.totalorder %s85, %s88
      %p97 = scmp.eq.s32.totalorder %s28, 1
      %p98 = por %p96, %p97
      %p99 = scmp.ne.s32.totalorder %s88, %s89
      %p100 = scmp.eq.s32.totalorder %s28, 0
      %p101 = por %p99, %p100
      %p102 = scmp.ne.s32.totalorder %s88, %s89
      %p103 = scmp.eq.s32.totalorder %s29, 1
      %p104 = por %p102, %p103
      %p106 = scmp.ne.s32.totalorder %s89, %s105
      %p107 = scmp.eq.s32.totalorder %s29, 0
      %p108 = por %p106, %p107
      %s109 = ssub.s32 %s23, %s30
      %p110 = scmp.eq.s32.totalorder %s109, 0
      %s112 = sadd.s32 %s111, 1
      %s113 = scalar_select %p110, %s111, %s112
      %p116 = pneg %p110
      %p117 = scmp.eq.s32.totalorder %s23, 1
      %p118 = por %p116, %p117
      %p119 = scmp.ne.s32.totalorder %s111, %s114
      %p120 = scmp.eq.s32.totalorder %s23, 0
      %p121 = por %p119, %p120
      %p122 = scmp.ne.s32.totalorder %s111, %s114
      %p123 = scmp.eq.s32.totalorder %s28, 1
      %p124 = por %p122, %p123
      %p125 = scmp.ne.s32.totalorder %s114, %s115
      %p126 = scmp.eq.s32.totalorder %s28, 0
      %p127 = por %p125, %p126
      %p128 = scmp.ne.s32.totalorder %s114, %s115
      %p129 = scmp.eq.s32.totalorder %s29, 1
      %p130 = por %p128, %p129
      %p132 = scmp.ne.s32.totalorder %s115, %s131
      %p133 = scmp.eq.s32.totalorder %s29, 0
      %p134 = por %p132, %p133
      %s135 = ssub.s32 %s23, %s30
      %p136 = scmp.eq.s32.totalorder %s135, 0
      %s138 = sadd.s32 %s137, 1
      %s139 = scalar_select %p136, %s137, %s138
      %p142 = pneg %p136
      %p143 = scmp.eq.s32.totalorder %s23, 1
      %p144 = por %p142, %p143
      %p145 = scmp.ne.s32.totalorder %s137, %s140
      %p146 = scmp.eq.s32.totalorder %s23, 0
      %p147 = por %p145, %p146
      %p148 = scmp.ne.s32.totalorder %s137, %s140
      %p149 = scmp.eq.s32.totalorder %s28, 1
      %p150 = por %p148, %p149
      %p151 = scmp.ne.s32.totalorder %s140, %s141
      %p152 = scmp.eq.s32.totalorder %s28, 0
      %p153 = por %p151, %p152
      %p154 = scmp.ne.s32.totalorder %s140, %s141
      %p155 = scmp.eq.s32.totalorder %s29, 1
      %p156 = por %p154, %p155
      %p158 = scmp.ne.s32.totalorder %s141, %s157
      %p159 = scmp.eq.s32.totalorder %s29, 0
      %p160 = por %p158, %p159
      %p161 = scmp.le.s32.totalorder 1, %s23
      %p162 = scmp.lt.s32.totalorder %s23, 3
      %p163 = pnand %p161, %p162
      %p164 = pneg %p163
      // Predicated region
      $region9: #{tpu_custom_call.1} parent=5 // pred_check
        _
      $region10: #{tpu_custom_call.1} parent=5 // pred_check_branch
        %166 = sbr.rel (%p163) target = $region12
      $region11: #{tpu_custom_call.1} parent=5 // pred_region
        %s167 = ssub.s32 %s23, 1
      $region12: #{tpu_custom_call.1} parent=5 // pred_fallthru
        _
      %p168 = scmp.lt.s32.totalorder %s23, 2
      // Predicated region
      $region13: #{tpu_custom_call.1} parent=5 // pred_check
        %p169 = pneg %p168
      $region14: #{tpu_custom_call.1} parent=5 // pred_check_branch
        %171 = sbr.rel (%p169) target = $region16
      $region15: #{tpu_custom_call.1} parent=5 // pred_region
        // Predicated region
        $region17: #{tpu_custom_call.1} parent=15 // pred_check
          %p172 = pneg %p43
        $region18: #{tpu_custom_call.1} parent=15 // pred_check_branch
          %174 = sbr.rel (%p172) target = $region20
        $region19: #{tpu_custom_call.1} parent=15 // pred_region
          %s175 = sand.u32 %s33, 1
          %s176 = scalar_lea.sflag [#allocation3], %s175
          %s177 = sand.u32 %s33, 1
          %s178 = smul.addr %s177, 8
          %s179 = scalar_lea.vmem [#allocation2], %s178
          %s181 = ssub.s32 128, 128
          %182 = vsyncadd %s176, %s181
          %s183 = smul.addr %s23, 128
          %s184 = scalar_lea.hbm %s0, %s183
          %s186 = sshll.u32 %s179, 4
          %s187 = int_to_ptr.vmem [resolvable:$true] %s186
          %189 = dma.hbm_to_vmem [thread:$0]  %s184, 128, %s187, %s176
        $region20: #{tpu_custom_call.1} parent=15 // pred_fallthru
          _
        // Predicated region
        $region21: #{tpu_custom_call.1} parent=15 // pred_check
          %p190 = pneg %p69
        $region22: #{tpu_custom_call.1} parent=15 // pred_check_branch
          %192 = sbr.rel (%p190) target = $region24
        $region23: #{tpu_custom_call.1} parent=15 // pred_region
          %s193 = sand.u32 %s59, 1
          %s194 = scalar_lea.sflag [#allocation6], %s193
          %s195 = sand.u32 %s59, 1
          %s196 = smul.addr %s195, 8
          %s197 = scalar_lea.vmem [#allocation5], %s196
          %s199 = ssub.s32 128, 128
          %200 = vsyncadd %s194, %s199
          %s201 = smul.addr %s23, 128
          %s202 = scalar_lea.hbm %s1, %s201
          %s204 = sshll.u32 %s197, 4
          %s205 = int_to_ptr.vmem [resolvable:$true] %s204
          %207 = dma.hbm_to_vmem [thread:$0]  %s202, 128, %s205, %s194
        $region24: #{tpu_custom_call.1} parent=15 // pred_fallthru
          _
      $region16: #{tpu_custom_call.1} parent=5 // pred_fallthru
        _
      %p208 = scmp.le.s32.totalorder 1, %s23
      %p209 = scmp.lt.s32.totalorder %s23, 3
      %p210 = pnand %p208, %p209
      %p211 = pneg %p210
      // Predicated region
      $region25: #{tpu_custom_call.1} parent=5 // pred_check
        _
      $region26: #{tpu_custom_call.1} parent=5 // pred_check_branch
        %213 = sbr.rel (%p210) target = $region28
      $region27: #{tpu_custom_call.1} parent=5 // pred_region
        %s214 = ssub.s32 %s23, 1
        %s215 = sand.u32 %s36, 1
        %s216 = scalar_lea.sflag [#allocation3], %s215
        %s217 = sand.u32 %s36, 1
        %s218 = smul.addr %s217, 8
        %s219 = scalar_lea.vmem [#allocation2], %s218
        // Predicated region
        $region29: #{tpu_custom_call.1} parent=27 // pred_check
          %p220 = pneg %p49
        $region30: #{tpu_custom_call.1} parent=27 // pred_check_branch
          %222 = sbr.rel (%p220) target = $region32
        $region31: #{tpu_custom_call.1} parent=27 // pred_region
          %223 = dma.done %s216, 128
        $region32: #{tpu_custom_call.1} parent=27 // pred_fallthru
          _
        %s224 = sand.u32 %s62, 1
        %s225 = scalar_lea.sflag [#allocation6], %s224
        %s226 = sand.u32 %s62, 1
        %s227 = smul.addr %s226, 8
        %s228 = scalar_lea.vmem [#allocation5], %s227
        // Predicated region
        $region33: #{tpu_custom_call.1} parent=27 // pred_check
          %p229 = pneg %p75
        $region34: #{tpu_custom_call.1} parent=27 // pred_check_branch
          %231 = sbr.rel (%p229) target = $region36
        $region35: #{tpu_custom_call.1} parent=27 // pred_region
          %232 = dma.done %s225, 128
        $region36: #{tpu_custom_call.1} parent=27 // pred_fallthru
          _
        %s233 = sand.u32 %s36, 1
        %s234 = scalar_lea.sflag [#allocation3], %s233
        %s235 = sand.u32 %s36, 1
        %s236 = smul.addr %s235, 8
        %s237 = scalar_lea.vmem [#allocation2], %s236
        %p238 = pneg %p49
        %p239 = pneg %p46
        %s240 = sand.u32 %s62, 1
        %s241 = scalar_lea.sflag [#allocation6], %s240
        %s242 = sand.u32 %s62, 1
        %s243 = smul.addr %s242, 8
        %s244 = scalar_lea.vmem [#allocation5], %s243
        %p245 = pneg %p75
        %p246 = pneg %p72
        %p247 = pneg %p101
        %p248 = pneg %p98
        %s249 = sand.u32 %s88, 1
        %s250 = scalar_lea.sflag [#allocation4], %s249
        %s251 = sand.u32 %s88, 1
        %s252 = smul.addr %s251, 8
        %s253 = scalar_lea.vmem [#allocation7], %s252
        %p254 = pneg %p127
        %p255 = pneg %p124
        %s256 = sand.u32 %s28, 1
        %s257 = scalar_lea.sflag [#allocation9], %s256
        %s258 = sand.u32 %s114, 1
        %s259 = smul.addr %s258, 8
        %s260 = scalar_lea.vmem [#allocation8], %s259
        %p261 = pneg %p153
        %p262 = pneg %p150
        %s263 = sand.u32 %s28, 1
        %s264 = scalar_lea.sflag [#allocation9], %s263
        %s265 = sand.u32 %s140, 1
        %s266 = smul.addr %s265, 8
        %s267 = scalar_lea.vmem [#allocation10], %s266
        %v268 = vld [vmem:[%s219] sm:$0xff]
        %v269 = vand.u32 2147483647, %v268
        %v270 = vsub.f32 0.0, %v269
        %v271 = vmul.f32 %v270, 1.442695
        %v272 = vpow.pop %v271
        %v273 = vadd.f32 %v272, 1.0
        %v274 = vrcp.pop %v273
        %v275 = vmul.f32 1.0, %v274
        %vm276 = vcmp.ge.f32.partialorder %v268, 0.0
        %v277 = vsub.f32 1.0, %v275
        %v278 = vsel %vm276, %v275, %v277
        %v279 = vmin.f32 %v268, 0.0
        %v280 = vlog2.pop %v273
        %v281 = vmul.f32 %v280, 0.6931472
        %v282 = vsub.f32 %v279, %v281
        %v283 = vld [vmem:[%s228] sm:$0xff]
        %vm284 = vcmp.lt.f32.partialorder %v283, %v278
        %v285 = vsel %vm284, 1.0, 0.0
        %286 = vst [vmem:[%s253] sm:$0xff] %v285
        %287 = vst [vmem:[%s260] sm:$0xff] %v278
        %v288 = vsub.f32 %v282, -0.6931472
        %v289 = vmul.f32 %v278, %v288
        %v290 = vsub.f32 1.0, %v278
        %v291 = vsub.f32 %v282, %v268
        %v292 = vsub.f32 %v291, -0.6931472
        %v293 = vmul.f32 %v290, %v292
        %v294 = vadd.f32 %v289, %v293
        %v295 = vrot.slane %v294, 4
        %v296 = vadd.f32 %v294, %v295
        %v297 = vrot.slane %v296, 2
        %v298 = vadd.f32 %v296, %v297
        %v299 = vrot.slane %v298, 1
        %v300 = vadd.f32 %v298, %v299
        %v301 = vlaneseq
        %v302 = vshrl.u32 %v301, 7
        %vm303 = vcmp.eq.s32.totalorder %v302, 0
        %v304 = vsel %vm303, %v300, 0.0
        %305 = vst [vmem:[%s267] sm:$0xff] %v304
        %s306 = sand.u32 %s88, 1
        %s307 = scalar_lea.sflag [#allocation4], %s306
        %s308 = sand.u32 %s88, 1
        %s309 = smul.addr %s308, 8
        %s310 = scalar_lea.vmem [#allocation7], %s309
        %s311 = sand.u32 %s28, 1
        %s312 = scalar_lea.sflag [#allocation9], %s311
        %s313 = sand.u32 %s114, 1
        %s314 = smul.addr %s313, 8
        %s315 = scalar_lea.vmem [#allocation8], %s314
        %s316 = sand.u32 %s28, 1
        %s317 = scalar_lea.sflag [#allocation9], %s316
        %s318 = sand.u32 %s140, 1
        %s319 = smul.addr %s318, 8
        %s320 = scalar_lea.vmem [#allocation10], %s319
        // Predicated region
        $region37: #{tpu_custom_call.1} parent=27 // pred_check
          %p321 = pneg %p98
        $region38: #{tpu_custom_call.1} parent=27 // pred_check_branch
          %323 = sbr.rel (%p321) target = $region40
        $region39: #{tpu_custom_call.1} parent=27 // pred_region
          %s325 = ssub.s32 128, 128
          %326 = vsyncadd %s307, %s325
          %s327 = smul.addr %s28, 128
          %s328 = scalar_lea.hbm %s2, %s327
          %s330 = sshll.u32 %s310, 4
          %s331 = int_to_ptr.vmem [resolvable:$true] %s330
          %333 = dma.vmem_to_hbm [thread:$0]  %s331, 128, %s328, %s307
        $region40: #{tpu_custom_call.1} parent=27 // pred_fallthru
          _
        // Predicated region
        $region41: #{tpu_custom_call.1} parent=27 // pred_check
          %p334 = pneg %p124
        $region42: #{tpu_custom_call.1} parent=27 // pred_check_branch
          %336 = sbr.rel (%p334) target = $region44
        $region43: #{tpu_custom_call.1} parent=27 // pred_region
          %s338 = ssub.s32 128, 128
          %339 = vsyncadd %s312, %s338
          %s340 = smul.addr %s28, 128
          %s341 = scalar_lea.hbm %s3, %s340
          %s343 = sshll.u32 %s315, 4
          %s344 = int_to_ptr.vmem [resolvable:$true] %s343
          %346 = dma.vmem_to_hbm [thread:$0]  %s344, 128, %s341, %s312
        $region44: #{tpu_custom_call.1} parent=27 // pred_fallthru
          _
        // Predicated region
        $region45: #{tpu_custom_call.1} parent=27 // pred_check
          %p347 = pneg %p150
        $region46: #{tpu_custom_call.1} parent=27 // pred_check_branch
          %349 = sbr.rel (%p347) target = $region48
        $region47: #{tpu_custom_call.1} parent=27 // pred_region
          %s351 = ssub.s32 128, 128
          %352 = vsyncadd %s317, %s351
          %s353 = smul.addr %s28, 128
          %s354 = scalar_lea.hbm %s4, %s353
          %s356 = sshll.u32 %s320, 4
          %s357 = int_to_ptr.vmem [resolvable:$true] %s356
          %359 = dma.vmem_to_hbm [thread:$0]  %s357, 128, %s354, %s317
        $region48: #{tpu_custom_call.1} parent=27 // pred_fallthru
          _
      $region28: #{tpu_custom_call.1} parent=5 // pred_fallthru
        _
      %p360 = scmp.le.s32.totalorder 2, %s23
      // Predicated region
      $region49: #{tpu_custom_call.1} parent=5 // pred_check
        %p361 = pneg %p360
      $region50: #{tpu_custom_call.1} parent=5 // pred_check_branch
        %363 = sbr.rel (%p361) target = $region52
      $region51: #{tpu_custom_call.1} parent=5 // pred_region
        %s364 = ssub.s32 %s23, 2
        // Predicated region
        $region53: #{tpu_custom_call.1} parent=51 // pred_check
          %p365 = pneg %p104
        $region54: #{tpu_custom_call.1} parent=51 // pred_check_branch
          %367 = sbr.rel (%p365) target = $region56
        $region55: #{tpu_custom_call.1} parent=51 // pred_region
          %s368 = sand.u32 %s89, 1
          %s369 = scalar_lea.sflag [#allocation4], %s368
          %s370 = sand.u32 %s89, 1
          %s371 = smul.addr %s370, 8
          %s372 = scalar_lea.vmem [#allocation7], %s371
          %373 = dma.done %s369, 128
        $region56: #{tpu_custom_call.1} parent=51 // pred_fallthru
          _
        // Predicated region
        $region57: #{tpu_custom_call.1} parent=51 // pred_check
          %p374 = pneg %p130
        $region58: #{tpu_custom_call.1} parent=51 // pred_check_branch
          %376 = sbr.rel (%p374) target = $region60
        $region59: #{tpu_custom_call.1} parent=51 // pred_region
          %s377 = sand.u32 %s29, 1
          %s378 = scalar_lea.sflag [#allocation9], %s377
          %s379 = sand.u32 %s115, 1
          %s380 = smul.addr %s379, 8
          %s381 = scalar_lea.vmem [#allocation8], %s380
          %382 = dma.done %s378, 128
        $region60: #{tpu_custom_call.1} parent=51 // pred_fallthru
          _
        // Predicated region
        $region61: #{tpu_custom_call.1} parent=51 // pred_check
          %p383 = pneg %p156
        $region62: #{tpu_custom_call.1} parent=51 // pred_check_branch
          %385 = sbr.rel (%p383) target = $region64
        $region63: #{tpu_custom_call.1} parent=51 // pred_region
          %s386 = sand.u32 %s29, 1
          %s387 = scalar_lea.sflag [#allocation9], %s386
          %s388 = sand.u32 %s141, 1
          %s389 = smul.addr %s388, 8
          %s390 = scalar_lea.vmem [#allocation10], %s389
          %391 = dma.done %s387, 128
        $region64: #{tpu_custom_call.1} parent=51 // pred_fallthru
          _
      $region52: #{tpu_custom_call.1} parent=5 // pred_fallthru
        _
    $region6: #{tpu_custom_call.1} parent=1 // loop_footer
      %s27 = sadd.s32 1, %s23
    $region7: #{tpu_custom_call.1} parent=1 // loop_footer_branch
      %22 = sbr.rel target = $region3
    $region8: #{tpu_custom_call.1} parent=1 // loop_exit
      _
    %392 = vsyncpa [#allocation3], 1
    %s393 = scalar_lea.sflag [#allocation3], 1
    %394 = vsyncpa %s393, 1
    %395 = vsyncpa [#allocation6], 1
    %s396 = scalar_lea.sflag [#allocation6], 1
    %397 = vsyncpa %s396, 1
    %398 = vsyncpa [#allocation4], 1
    %s399 = scalar_lea.sflag [#allocation4], 1
    %400 = vsyncpa %s399, 1
    %401 = vsyncpa [#allocation9], 1
    %s402 = scalar_lea.sflag [#allocation9], 1
    %403 = vsyncpa %s402, 1

</llo_original>
